<compile_context>
chip_gen: v5e
topology: v5e:2x2
jax: 0.10.0
libtpu: 0.0.40
codegen_flags: <defaults>
</compile_context>

<pallas_src>
import jax
import jax.numpy as jnp
from jax.experimental import pallas as pl
from jax.experimental.pallas import tpu as pltpu

LANES = 128        # lane width
NUM_SPLITS = 2     # leading "parallel" grid axis (both TCs on v7x)
TILE_R_MAX = 2048  # rows per block: (2048,128) f32 = 1 MiB/input/buffer
PAD_SENTINEL = -1e4  # finite in f16/bf16/f32; sigmoid->0, BCE->0, x*0->0


def _ce_dice_kernel(x_ref, y_ref, acc_ref):
    """acc_ref is a (32, 128) f32 partial-sum tile (resident per split):
         rows  0: 7  -> partial sums of sigmoid(x) * y
         rows  8:15  -> partial sums of sigmoid(x)
         rows 16:23  -> partial sums of y
         rows 24:31  -> partial sums of per-element BCE-with-logits
    """
    i = pl.program_id(1)

    @pl.when(i == 0)
    def _init():
        acc_ref[...] = jnp.zeros_like(acc_ref)

    x = x_ref[...].astype(jnp.float32)
    y = y_ref[...].astype(jnp.float32)

    p = jax.nn.sigmoid(x)
    # Numerically-stable BCEWithLogits (pos_weight = 1):
    #   max(x, 0) - x*y + log(1 + exp(-|x|)),  log(1 + exp(-|x|)) = -log(sigmoid(|x|))
    # Reuse the sigmoid already computed for Dice: sigmoid(|x|) = p (x>=0) else 1-p.
    log_term = -jnp.log(jnp.where(x >= 0.0, p, 1.0 - p))
    bce = jnp.maximum(x, 0.0) - x * y + log_term

    sub = x.shape[0] // 8

    def fold(v):  # (tile_r, 128) -> (8, 128): pure elementwise VPU adds
        return jnp.sum(v.reshape(sub, 8, LANES), axis=0)

    acc_ref[0:8, :] += fold(p * y)
    acc_ref[8:16, :] += fold(p)
    acc_ref[16:24, :] += fold(y)
    acc_ref[24:32, :] += fold(bce)


def _round_up(n, m):
    return -(-n // m) * m


def ce_dice_loss(prediction, targets, *, d_weight=0.5, smooth=1e-8):
    """CE_DiceLoss forward. prediction/targets: same shape (e.g. NCHW)."""
    total = prediction.size
    x = prediction.reshape(-1)          # keep native dtype; cast in-kernel
    y = targets.reshape(-1)

    rows = -(-total // LANES)
    rows_per_split = -(-rows // NUM_SPLITS)
    tile_r = min(TILE_R_MAX, _round_up(max(rows_per_split, 1), 8))
    blocks_per_split = -(-rows_per_split // tile_r)
    rows_padded = NUM_SPLITS * blocks_per_split * tile_r

    n_pad = rows_padded * LANES - total
    if n_pad:
        # Sentinel padding (no mask stream needed): sigmoid(PAD_SENTINEL)=0 and
        # every BCE term is exactly 0 for (x=PAD_SENTINEL, y=0).
        x = jnp.pad(x, (0, n_pad), constant_values=PAD_SENTINEL)
        y = jnp.pad(y, (0, n_pad))

    x = x.reshape(rows_padded, LANES)
    y = y.reshape(rows_padded, LANES)

    in_spec = pl.BlockSpec(
        (tile_r, LANES), lambda s, i: (s * blocks_per_split + i, 0))
    out_spec = pl.BlockSpec((None, 32, LANES), lambda s, i: (s, 0, 0))

    partial = pl.pallas_call(
        _ce_dice_kernel,
        out_shape=jax.ShapeDtypeStruct((NUM_SPLITS, 32, LANES), jnp.float32),
        grid_spec=pltpu.PrefetchScalarGridSpec(
            num_scalar_prefetch=0,
            grid=(NUM_SPLITS, blocks_per_split),
            in_specs=[in_spec, in_spec],
            out_specs=out_spec,
        ),
        compiler_params=pltpu.CompilerParams(
            dimension_semantics=("parallel", "arbitrary")),
    )(x, y)

    # Final (tiny) cross-split / cross-lane reduction + scalar combine.
    sums = jnp.sum(partial.reshape(NUM_SPLITS, 4, 8 * LANES), axis=(0, 2))
    s_py, s_p, s_y, s_bce = sums[0], sums[1], sums[2], sums[3]
    dice = 1.0 - (2.0 * s_py + smooth) / (s_p + s_y + smooth)
    bce_mean = s_bce / total            # reduction='mean'
    return d_weight * dice + (1.0 - d_weight) * bce_mean


def _reference(prediction, targets, d_weight=0.5, smooth=1e-8):
    x = prediction.astype(jnp.float32)
    y = targets.astype(jnp.float32)
    p = jax.nn.sigmoid(x)
    dice = 1.0 - (2.0 * jnp.sum(p * y) + smooth) / (jnp.sum(p) + jnp.sum(y) + smooth)
    bce = jnp.mean(jnp.maximum(x, 0.0) - x * y + jnp.log1p(jnp.exp(-jnp.abs(x))))
    return d_weight * dice + (1.0 - d_weight) * bce


if __name__ == "__main__":
    key = jax.random.PRNGKey(0)
    kx, ky = jax.random.split(key)
    # NCHW, like the PyTorch module's conv-style inputs.
    prediction = jax.random.normal(kx, (2, 4, 16, 16), dtype=jnp.float32)
    targets = (jax.random.uniform(ky, (2, 4, 16, 16)) > 0.5).astype(jnp.float32)

    loss = ce_dice_loss(prediction, targets)
    jax.block_until_ready(loss)

    ref = _reference(prediction, targets)
    assert jnp.allclose(loss, ref, rtol=1e-5, atol=1e-5), (loss, ref)
    print("KERNEL_OK")
</pallas_src>

<mosaic_0001>
module attributes {stable_mosaic.version = 11 : i64} {
  func.func @_ce_dice_kernel(%arg0: i32, %arg1: i32, %arg2: memref<8x128xf32, #tpu.memory_space<vmem>>, %arg3: memref<8x128xf32, #tpu.memory_space<vmem>>, %arg4: memref<1x32x128xf32, #tpu.memory_space<vmem>>) attributes {dimension_semantics = [#tpu.dimension_semantics<parallel>, #tpu.dimension_semantics<arbitrary>], iteration_bounds = array<i64: 2, 1>, scalar_prefetch = 0 : i64, scratch_operands = 0 : i64, tpu.core_type = #tpu.core_type<tc>, window_params = [{transform_indices = @transform_0, window_bounds = array<i64: 8, 128>}, {transform_indices = @transform_1, window_bounds = array<i64: 8, 128>}, {transform_indices = @transform_2, window_bounds = array<i64: 1, 32, 128>}]} {
    %c0_i32 = arith.constant 0 : i32
    %0 = arith.cmpi eq, %arg1, %c0_i32 : i32
    %1 = arith.extui %0 : i1 to i32
    %c0_i32_0 = arith.constant 0 : i32
    %2 = arith.cmpi ne, %1, %c0_i32_0 : i32
    scf.if %2 {
      %cst_33 = arith.constant 0.000000e+00 : f32
      %56 = vector.broadcast %cst_33 : f32 to vector<32x128xf32>
      %c0_34 = arith.constant 0 : index
      %c0_35 = arith.constant 0 : index
      %c0_36 = arith.constant 0 : index
      %57 = vector.load %arg4[%c0_34, %c0_35, %c0_36] : memref<1x32x128xf32, #tpu.memory_space<vmem>>, vector<1x32x128xf32>
      %58 = vector.shape_cast %57 : vector<1x32x128xf32> to vector<32x128xf32>
      %59 = vector.shape_cast %56 : vector<32x128xf32> to vector<1x32x128xf32>
      tpu.vector_store %arg4[%c0_34, %c0_35, %c0_36], %59 {strides = array<i32>} : memref<1x32x128xf32, #tpu.memory_space<vmem>>, vector<1x32x128xf32>,
    } else {
    }
    %c0 = arith.constant 0 : index
    %c0_1 = arith.constant 0 : index
    %3 = vector.load %arg2[%c0, %c0_1] : memref<8x128xf32, #tpu.memory_space<vmem>>, vector<8x128xf32>
    %c0_2 = arith.constant 0 : index
    %c0_3 = arith.constant 0 : index
    %4 = vector.load %arg3[%c0_2, %c0_3] : memref<8x128xf32, #tpu.memory_space<vmem>>, vector<8x128xf32>
    %5 = arith.negf %3 : vector<8x128xf32>
    %6 = math.exp %5 : vector<8x128xf32>
    %cst = arith.constant 1.000000e+00 : f32
    %7 = vector.broadcast %cst : f32 to vector<8x128xf32>
    %8 = arith.addf %7, %6 : vector<8x128xf32>
    %9 = arith.divf %7, %8 : vector<8x128xf32>
    %cst_4 = arith.constant 0.000000e+00 : f32
    %10 = vector.broadcast %cst_4 : f32 to vector<8x128xf32>
    %11 = arith.cmpf oge, %3, %10 : vector<8x128xf32>
    %cst_5 = arith.constant 1.000000e+00 : f32
    %12 = vector.broadcast %cst_5 : f32 to vector<8x128xf32>
    %13 = arith.subf %12, %9 : vector<8x128xf32>
    %14 = arith.select %11, %9, %13 : vector<8x128xi1>, vector<8x128xf32>
    %15 = math.log %14 : vector<8x128xf32>
    %cst_6 = arith.constant 0.000000e+00 : f32
    %16 = vector.broadcast %cst_6 : f32 to vector<8x128xf32>
    %17 = arith.subf %16, %15 : vector<8x128xf32>
    %cst_7 = arith.constant 0.000000e+00 : f32
    %18 = vector.broadcast %cst_7 : f32 to vector<8x128xf32>
    %19 = arith.maximumf %3, %18 : vector<8x128xf32>
    %20 = arith.mulf %3, %4 : vector<8x128xf32>
    %21 = arith.subf %19, %20 : vector<8x128xf32>
    %22 = arith.addf %21, %17 : vector<8x128xf32>
    %c0_8 = arith.constant 0 : index
    %c0_9 = arith.constant 0 : index
    %c0_10 = arith.constant 0 : index
    %23 = vector.load %arg4[%c0_8, %c0_9, %c0_10] : memref<1x32x128xf32, #tpu.memory_space<vmem>>, vector<1x8x128xf32>
    %24 = vector.shape_cast %23 : vector<1x8x128xf32> to vector<8x128xf32>
    %25 = arith.mulf %9, %4 : vector<8x128xf32>
    %26 = vector.shape_cast %25 : vector<8x128xf32> to vector<1x8x128xf32>
    %cst_11 = arith.constant dense<0.000000e+00> : vector<8x128xf32>
    %27 = vector.multi_reduction <add>, %26, %cst_11 [0] : vector<1x8x128xf32> to vector<8x128xf32>
    %28 = arith.addf %24, %27 : vector<8x128xf32>
    %c0_12 = arith.constant 0 : index
    %c0_13 = arith.constant 0 : index
    %c0_14 = arith.constant 0 : index
    %29 = vector.load %arg4[%c0_12, %c0_13, %c0_14] : memref<1x32x128xf32, #tpu.memory_space<vmem>>, vector<1x8x128xf32>
    %30 = vector.shape_cast %29 : vector<1x8x128xf32> to vector<8x128xf32>
    %31 = vector.shape_cast %28 : vector<8x128xf32> to vector<1x8x128xf32>
    tpu.vector_store %arg4[%c0_12, %c0_13, %c0_14], %31 {strides = array<i32>} : memref<1x32x128xf32, #tpu.memory_space<vmem>>, vector<1x8x128xf32>,
    %c0_15 = arith.constant 0 : index
    %c8 = arith.constant 8 : index
    %c0_16 = arith.constant 0 : index
    %32 = vector.load %arg4[%c0_15, %c8, %c0_16] : memref<1x32x128xf32, #tpu.memory_space<vmem>>, vector<1x8x128xf32>
    %33 = vector.shape_cast %32 : vector<1x8x128xf32> to vector<8x128xf32>
    %34 = vector.shape_cast %9 : vector<8x128xf32> to vector<1x8x128xf32>
    %cst_17 = arith.constant dense<0.000000e+00> : vector<8x128xf32>
    %35 = vector.multi_reduction <add>, %34, %cst_17 [0] : vector<1x8x128xf32> to vector<8x128xf32>
    %36 = arith.addf %33, %35 : vector<8x128xf32>
    %c0_18 = arith.constant 0 : index
    %c8_19 = arith.constant 8 : index
    %c0_20 = arith.constant 0 : index
    %37 = vector.load %arg4[%c0_18, %c8_19, %c0_20] : memref<1x32x128xf32, #tpu.memory_space<vmem>>, vector<1x8x128xf32>
    %38 = vector.shape_cast %37 : vector<1x8x128xf32> to vector<8x128xf32>
    %39 = vector.shape_cast %36 : vector<8x128xf32> to vector<1x8x128xf32>
    tpu.vector_store %arg4[%c0_18, %c8_19, %c0_20], %39 {strides = array<i32>} : memref<1x32x128xf32, #tpu.memory_space<vmem>>, vector<1x8x128xf32>,
    %c0_21 = arith.constant 0 : index
    %c16 = arith.constant 16 : index
    %c0_22 = arith.constant 0 : index
    %40 = vector.load %arg4[%c0_21, %c16, %c0_22] : memref<1x32x128xf32, #tpu.memory_space<vmem>>, vector<1x8x128xf32>
    %41 = vector.shape_cast %40 : vector<1x8x128xf32> to vector<8x128xf32>
    %42 = vector.shape_cast %4 : vector<8x128xf32> to vector<1x8x128xf32>
    %cst_23 = arith.constant dense<0.000000e+00> : vector<8x128xf32>
    %43 = vector.multi_reduction <add>, %42, %cst_23 [0] : vector<1x8x128xf32> to vector<8x128xf32>
    %44 = arith.addf %41, %43 : vector<8x128xf32>
    %c0_24 = arith.constant 0 : index
    %c16_25 = arith.constant 16 : index
    %c0_26 = arith.constant 0 : index
    %45 = vector.load %arg4[%c0_24, %c16_25, %c0_26] : memref<1x32x128xf32, #tpu.memory_space<vmem>>, vector<1x8x128xf32>
    %46 = vector.shape_cast %45 : vector<1x8x128xf32> to vector<8x128xf32>
    %47 = vector.shape_cast %44 : vector<8x128xf32> to vector<1x8x128xf32>
    tpu.vector_store %arg4[%c0_24, %c16_25, %c0_26], %47 {strides = array<i32>} : memref<1x32x128xf32, #tpu.memory_space<vmem>>, vector<1x8x128xf32>,
    %c0_27 = arith.constant 0 : index
    %c24 = arith.constant 24 : index
    %c0_28 = arith.constant 0 : index
    %48 = vector.load %arg4[%c0_27, %c24, %c0_28] : memref<1x32x128xf32, #tpu.memory_space<vmem>>, vector<1x8x128xf32>
    %49 = vector.shape_cast %48 : vector<1x8x128xf32> to vector<8x128xf32>
    %50 = vector.shape_cast %22 : vector<8x128xf32> to vector<1x8x128xf32>
    %cst_29 = arith.constant dense<0.000000e+00> : vector<8x128xf32>
    %51 = vector.multi_reduction <add>, %50, %cst_29 [0] : vector<1x8x128xf32> to vector<8x128xf32>
    %52 = arith.addf %49, %51 : vector<8x128xf32>
    %c0_30 = arith.constant 0 : index
    %c24_31 = arith.constant 24 : index
    %c0_32 = arith.constant 0 : index
    %53 = vector.load %arg4[%c0_30, %c24_31, %c0_32] : memref<1x32x128xf32, #tpu.memory_space<vmem>>, vector<1x8x128xf32>
    %54 = vector.shape_cast %53 : vector<1x8x128xf32> to vector<8x128xf32>
    %55 = vector.shape_cast %52 : vector<8x128xf32> to vector<1x8x128xf32>
    tpu.vector_store %arg4[%c0_30, %c24_31, %c0_32], %55 {strides = array<i32>} : memref<1x32x128xf32, #tpu.memory_space<vmem>>, vector<1x8x128xf32>,
    return
  }
  func.func @transform_0(%arg0: i32, %arg1: i32) -> (i32, i32) {
    %c1_i32 = arith.constant 1 : i32
    %0 = arith.muli %arg0, %c1_i32 : i32
    %1 = arith.addi %0, %arg1 : i32
    %c0_i32 = arith.constant 0 : i32
    %c0_i32_0 = arith.constant 0 : i32
    return %1, %c0_i32 : i32, i32
  }
  func.func @transform_1(%arg0: i32, %arg1: i32) -> (i32, i32) {
    %c1_i32 = arith.constant 1 : i32
    %0 = arith.muli %arg0, %c1_i32 : i32
    %1 = arith.addi %0, %arg1 : i32
    %c0_i32 = arith.constant 0 : i32
    %c0_i32_0 = arith.constant 0 : i32
    return %1, %c0_i32 : i32, i32
  }
  func.func @transform_2(%arg0: i32, %arg1: i32) -> (i32, i32, i32) {
    %c0_i32 = arith.constant 0 : i32
    %c0_i32_0 = arith.constant 0 : i32
    %c0_i32_1 = arith.constant 0 : i32
    return %arg0, %c0_i32, %c0_i32_0 : i32, i32, i32
  }
}

</mosaic_0001>

<llo_original>
// kernel: tpu_custom_call.1
$region0: #{tpu_custom_call.1}
  #allocation0 [shape = 'u32[]', space=smem, size = 0x4, offset = 0x4, fixed_abs, tag = 'smem constant byte address 0x4 - core index']
  #allocation1 [shape = 'u32[72,128]{1,0:T(1,128)}', space=vmem, size = 0x9000, scoped, tag = 'internal scratch']
  %s0 = inlined_call_operand.hbm [shape: f32[16,128], index: 0, kind: input, shape index: {}]
  %s1 = inlined_call_operand.hbm [shape: f32[16,128], index: 1, kind: input, shape index: {}]
  %s2 = inlined_call_operand.hbm [shape: f32[2,32,128], index: 2, kind: output, shape index: {}]
  %s3 = sld [smem:[#allocation0]]
  $region53: #{tpu_custom_call.1} parent=0
    _
  %s5 = ssub.s32 1, %s3
  %s6 = scalar_select 0, %s5, %s3
  $region1: #{tpu_custom_call.1} parent=0
    #allocation2 [shape = 'u8[8192]{0}', space=vmem, size = 0x2000, scoped, tag = 'input window, operand 0']
    #allocation3 [shape = 's32[2]{0}', space=sflag, size = 0x8, scoped, tag = 'scoped memory for tpu_custom_call.1']
    #allocation4 [shape = 's32[2]{0}', space=sflag, size = 0x8, scoped, tag = 'scoped memory for tpu_custom_call.1']
    #allocation5 [shape = 'u8[8192]{0}', space=vmem, size = 0x2000, scoped, tag = 'input window, operand 1']
    #allocation6 [shape = 's32[2]{0}', space=sflag, size = 0x8, scoped, tag = 'scoped memory for tpu_custom_call.1']
    #allocation7 [shape = 'u8[32768]{0}', space=vmem, size = 0x8000, scoped, tag = 'output window, operand 0']
    %7 = vsyncpa [#allocation3], 0
    %s8 = scalar_lea.sflag [#allocation3], 1
    %9 = vsyncpa %s8, 0
    %10 = vsyncpa [#allocation6], 0
    %s11 = scalar_lea.sflag [#allocation6], 1
    %12 = vsyncpa %s11, 0
    %13 = vsyncpa [#allocation4], 0
    %s14 = scalar_lea.sflag [#allocation4], 1
    %15 = vsyncpa %s14, 0
    loop: start=0, step=1, limit=4
    $region2: #{tpu_custom_call.1} parent=1 // loop_pre_header
      _
    $region3: #{tpu_custom_call.1} parent=1 // loop_header
      %s17 = sphi 0, %s21
      %p18 = scmp.ge.s32.totalorder %s17, 4
      %s24 = sphi 0, %s36
      %s25 = sphi 0, %s32
      %s26 = sphi 0, %s24
      %s27 = sphi 0, %s25
      %s28 = sphi 0, %s26
      %s29 = sphi 0, %s27
      %s41 = sphi 0, %s43
      %s44 = sphi 0, %s41
      %s45 = sphi 0, %s44
      %s61 = sphi 0, %s45
      %s69 = sphi 0, %s71
      %s72 = sphi 0, %s69
      %s73 = sphi 0, %s72
      %s89 = sphi 0, %s73
      %s95 = sphi 0, %s97
      %s98 = sphi 0, %s95
      %s99 = sphi 0, %s98
      %s115 = sphi 0, %s99
    $region4: #{tpu_custom_call.1} parent=1 // loop_header_branch
      %20 = sbr.rel (%p18) target = $region8
    $region5: #{tpu_custom_call.1} parent=1 // loop_body
      %s22 = ssub.s32 %s17, 1
      %s23 = ssub.s32 %s17, 2
      %s30 = sadd.s32 1, %s25
      %p31 = scmp.ge.s32.totalorder %s30, 1
      %s32 = scalar_select %p31, 0, %s30
      %s33 = sadd.s32 1, %s24
      %s34 = scalar_select %p31, %s33, %s24
      %p35 = scmp.ge.s32.totalorder %s34, 2
      %s36 = scalar_select %p35, 0, %s34
      %s37 = sadd.s32 %s24, %s25
      %s38 = sadd.s32 %s36, %s32
      %s39 = ssub.s32 %s37, %s38
      %p40 = scmp.eq.s32.totalorder %s39, 0
      %s42 = sadd.s32 %s41, 1
      %s43 = scalar_select %p40, %s41, %s42
      %p46 = pneg %p40
      %p47 = scmp.eq.s32.totalorder %s17, 1
      %p48 = por %p46, %p47
      %p49 = scmp.ne.s32.totalorder %s41, %s44
      %p50 = scmp.eq.s32.totalorder %s17, 0
      %p51 = por %p49, %p50
      %p52 = scmp.ne.s32.totalorder %s41, %s44
      %p53 = scmp.eq.s32.totalorder %s22, 1
      %p54 = por %p52, %p53
      %p55 = scmp.ne.s32.totalorder %s44, %s45
      %p56 = scmp.eq.s32.totalorder %s22, 0
      %p57 = por %p55, %p56
      %p58 = scmp.ne.s32.totalorder %s44, %s45
      %p59 = scmp.eq.s32.totalorder %s23, 1
      %p60 = por %p58, %p59
      %p62 = scmp.ne.s32.totalorder %s45, %s61
      %p63 = scmp.eq.s32.totalorder %s23, 0
      %p64 = por %p62, %p63
      %s65 = sadd.s32 %s24, %s25
      %s66 = sadd.s32 %s36, %s32
      %s67 = ssub.s32 %s65, %s66
      %p68 = scmp.eq.s32.totalorder %s67, 0
      %s70 = sadd.s32 %s69, 1
      %s71 = scalar_select %p68, %s69, %s70
      %p74 = pneg %p68
      %p75 = scmp.eq.s32.totalorder %s17, 1
      %p76 = por %p74, %p75
      %p77 = scmp.ne.s32.totalorder %s69, %s72
      %p78 = scmp.eq.s32.totalorder %s17, 0
      %p79 = por %p77, %p78
      %p80 = scmp.ne.s32.totalorder %s69, %s72
      %p81 = scmp.eq.s32.totalorder %s22, 1
      %p82 = por %p80, %p81
      %p83 = scmp.ne.s32.totalorder %s72, %s73
      %p84 = scmp.eq.s32.totalorder %s22, 0
      %p85 = por %p83, %p84
      %p86 = scmp.ne.s32.totalorder %s72, %s73
      %p87 = scmp.eq.s32.totalorder %s23, 1
      %p88 = por %p86, %p87
      %p90 = scmp.ne.s32.totalorder %s73, %s89
      %p91 = scmp.eq.s32.totalorder %s23, 0
      %p92 = por %p90, %p91
      %s93 = ssub.s32 %s24, %s36
      %p94 = scmp.eq.s32.totalorder %s93, 0
      %s96 = sadd.s32 %s95, 1
      %s97 = scalar_select %p94, %s95, %s96
      %p100 = pneg %p94
      %p101 = scmp.eq.s32.totalorder %s17, 1
      %p102 = por %p100, %p101
      %p103 = scmp.ne.s32.totalorder %s95, %s98
      %p104 = scmp.eq.s32.totalorder %s17, 0
      %p105 = por %p103, %p104
      %p106 = scmp.ne.s32.totalorder %s95, %s98
      %p107 = scmp.eq.s32.totalorder %s22, 1
      %p108 = por %p106, %p107
      %p109 = scmp.ne.s32.totalorder %s98, %s99
      %p110 = scmp.eq.s32.totalorder %s22, 0
      %p111 = por %p109, %p110
      %p112 = scmp.ne.s32.totalorder %s98, %s99
      %p113 = scmp.eq.s32.totalorder %s23, 1
      %p114 = por %p112, %p113
      %p116 = scmp.ne.s32.totalorder %s99, %s115
      %p117 = scmp.eq.s32.totalorder %s23, 0
      %p118 = por %p116, %p117
      %p119 = scmp.le.s32.totalorder 1, %s17
      %p120 = scmp.lt.s32.totalorder %s17, 3
      %p121 = pnand %p119, %p120
      %p122 = pneg %p121
      // Predicated region
      $region9: #{tpu_custom_call.1} parent=5 // pred_check
        _
      $region10: #{tpu_custom_call.1} parent=5 // pred_check_branch
        %124 = sbr.rel (%p121) target = $region12
      $region11: #{tpu_custom_call.1} parent=5 // pred_region
        %s125 = ssub.s32 %s17, 1
      $region12: #{tpu_custom_call.1} parent=5 // pred_fallthru
        _
      %p126 = scmp.lt.s32.totalorder %s17, 2
      // Predicated region
      $region13: #{tpu_custom_call.1} parent=5 // pred_check
        %p127 = pneg %p126
      $region14: #{tpu_custom_call.1} parent=5 // pred_check_branch
        %129 = sbr.rel (%p127) target = $region16
      $region15: #{tpu_custom_call.1} parent=5 // pred_region
        // Predicated region
        $region17: #{tpu_custom_call.1} parent=15 // pred_check
          %p130 = pneg %p51
        $region18: #{tpu_custom_call.1} parent=15 // pred_check_branch
          %132 = sbr.rel (%p130) target = $region20
        $region19: #{tpu_custom_call.1} parent=15 // pred_region
          %s133 = sand.u32 %s41, 1
          %s134 = scalar_lea.sflag [#allocation3], %s133
          %s135 = sand.u32 %s41, 1
          %s136 = smul.addr %s135, 8
          %s137 = scalar_lea.vmem [#allocation2], %s136
          %s138 = sadd.s32 %s24, %s25
          %140 = vsyncadd %s134, 0
          %s141 = smul.addr %s138, 8
          %s142 = scalar_lea.hbm %s0, %s141
          %s144 = sshll.u32 %s142, 4
          %s145 = int_to_ptr.hbm [resolvable:$true] %s144
          %s146 = sshll.u32 %s137, 4
          %s147 = int_to_ptr.vmem [resolvable:$true] %s146
          %149 = dma.hbm_to_vmem [thread:$0]  %s145, 128, %s147, %s134
        $region20: #{tpu_custom_call.1} parent=15 // pred_fallthru
          _
        // Predicated region
        $region21: #{tpu_custom_call.1} parent=15 // pred_check
          %p150 = pneg %p79
        $region22: #{tpu_custom_call.1} parent=15 // pred_check_branch
          %152 = sbr.rel (%p150) target = $region24
        $region23: #{tpu_custom_call.1} parent=15 // pred_region
          %s153 = sand.u32 %s69, 1
          %s154 = scalar_lea.sflag [#allocation6], %s153
          %s155 = sand.u32 %s69, 1
          %s156 = smul.addr %s155, 8
          %s157 = scalar_lea.vmem [#allocation5], %s156
          %s158 = sadd.s32 %s24, %s25
          %160 = vsyncadd %s154, 0
          %s161 = smul.addr %s158, 8
          %s162 = scalar_lea.hbm %s1, %s161
          %s164 = sshll.u32 %s162, 4
          %s165 = int_to_ptr.hbm [resolvable:$true] %s164
          %s166 = sshll.u32 %s157, 4
          %s167 = int_to_ptr.vmem [resolvable:$true] %s166
          %169 = dma.hbm_to_vmem [thread:$0]  %s165, 128, %s167, %s154
        $region24: #{tpu_custom_call.1} parent=15 // pred_fallthru
          _
      $region16: #{tpu_custom_call.1} parent=5 // pred_fallthru
        _
      %p170 = scmp.le.s32.totalorder 1, %s17
      %p171 = scmp.lt.s32.totalorder %s17, 3
      %p172 = pnand %p170, %p171
      %p173 = pneg %p172
      // Predicated region
      $region25: #{tpu_custom_call.1} parent=5 // pred_check
        _
      $region26: #{tpu_custom_call.1} parent=5 // pred_check_branch
        %175 = sbr.rel (%p172) target = $region28
      $region27: #{tpu_custom_call.1} parent=5 // pred_region
        %s176 = ssub.s32 %s17, 1
        %s177 = sand.u32 %s44, 1
        %s178 = scalar_lea.sflag [#allocation3], %s177
        %s179 = sand.u32 %s44, 1
        %s180 = smul.addr %s179, 8
        %s181 = scalar_lea.vmem [#allocation2], %s180
        // Predicated region
        $region29: #{tpu_custom_call.1} parent=27 // pred_check
          %p182 = pneg %p57
        $region30: #{tpu_custom_call.1} parent=27 // pred_check_branch
          %184 = sbr.rel (%p182) target = $region32
        $region31: #{tpu_custom_call.1} parent=27 // pred_region
          %186 = dma.done %s178, 128
        $region32: #{tpu_custom_call.1} parent=27 // pred_fallthru
          _
        %s187 = sand.u32 %s72, 1
        %s188 = scalar_lea.sflag [#allocation6], %s187
        %s189 = sand.u32 %s72, 1
        %s190 = smul.addr %s189, 8
        %s191 = scalar_lea.vmem [#allocation5], %s190
        // Predicated region
        $region33: #{tpu_custom_call.1} parent=27 // pred_check
          %p192 = pneg %p85
        $region34: #{tpu_custom_call.1} parent=27 // pred_check_branch
          %194 = sbr.rel (%p192) target = $region36
        $region35: #{tpu_custom_call.1} parent=27 // pred_region
          %196 = dma.done %s188, 128
        $region36: #{tpu_custom_call.1} parent=27 // pred_fallthru
          _
        %s197 = sand.u32 %s44, 1
        %s198 = scalar_lea.sflag [#allocation3], %s197
        %s199 = sand.u32 %s44, 1
        %s200 = smul.addr %s199, 8
        %s201 = scalar_lea.vmem [#allocation2], %s200
        %p202 = pneg %p57
        %p203 = pneg %p54
        %s204 = sand.u32 %s72, 1
        %s205 = scalar_lea.sflag [#allocation6], %s204
        %s206 = sand.u32 %s72, 1
        %s207 = smul.addr %s206, 8
        %s208 = scalar_lea.vmem [#allocation5], %s207
        %p209 = pneg %p85
        %p210 = pneg %p82
        %p211 = pneg %p111
        %p212 = pneg %p108
        %s213 = sand.u32 %s98, 1
        %s214 = scalar_lea.sflag [#allocation4], %s213
        %s215 = sand.u32 %s98, 1
        %s216 = smul.addr %s215, 32
        %s217 = scalar_lea.vmem [#allocation7], %s216
        %s218 = sadd.s32 %s26, %s27
        %s219 = sadd.s32 %s26, %s27
        %p220 = scmp.eq.s32.totalorder %s27, 0
        // Predicated region
        $region37: #{tpu_custom_call.1} parent=27 // pred_check
          %p221 = pneg %p220
        $region38: #{tpu_custom_call.1} parent=27 // pred_check_branch
          %223 = sbr.rel (%p221) target = $region40
        $region39: #{tpu_custom_call.1} parent=27 // pred_region
          %224 = vst [vmem:[%s217] sm:$0xff] 0.0
          %225 = vst [vmem:[%s217 + $0x8] sm:$0xff] 0.0
          %226 = vst [vmem:[%s217 + $0x10] sm:$0xff] 0.0
          %227 = vst [vmem:[%s217 + $0x18] sm:$0xff] 0.0
        $region40: #{tpu_custom_call.1} parent=27 // pred_fallthru
          _
        %v228 = vld [vmem:[%s181] sm:$0xff]
        %v229 = vld [vmem:[%s191] sm:$0xff]
        %v230 = vxor.u32 %v228, 2147483648
        %v231 = vmul.f32 %v230, 1.442695
        %v232 = vpow.pop %v231
        %v233 = vadd.f32 %v232, 1.0
        %v234 = vrcp.pop %v233
        %v235 = vmul.f32 %v233, %v234
        %v236 = vsub.f32 1.0, %v235
        %v237 = vmul.f32 %v234, %v236
        %v238 = vadd.f32 %v234, %v237
        %vm239 = vweird.f32 %v233
        %vm240 = vweird.f32 %v234
        %vm241 = vmor %vm239, %vm240
        %v242 = vsel %vm241, %v234, %v238
        %v243 = vand.u32 2147483647, %v233
        %vm244 = vcmp.eq.f32.partialorder %v243, 8.507059e+37
        %v245 = vand.u32 %v233, 2147483648
        %v246 = vor.u32 1.1754944e-38, %v245
        %v247 = vsel %vm244, %v246, %v242
        %v248 = vmul.f32 1.0, %v247
        %vm249 = vcmp.ge.f32.partialorder %v228, 0.0
        %v250 = vsub.f32 1.0, %v248
        %v251 = vsel %vm249, %v248, %v250
        %v252 = vlog2.pop %v251
        %v253 = vmul.f32 %v252, 0.6931472
        %v254 = vsub.f32 0.0, %v253
        %v255 = vmax.f32 %v228, 0.0
        %v256 = vmul.f32 %v228, %v229
        %v257 = vsub.f32 %v255, %v256
        %v258 = vadd.f32 %v257, %v254
        %v259 = vld [vmem:[%s217] sm:$0xff]
        %v260 = vmul.f32 %v248, %v229
        %v261 = vadd.f32 %v260, 0.0
        %v262 = vadd.f32 %v259, %v261
        %263 = vst [vmem:[%s217] sm:$0xff] %v262
        %v264 = vld [vmem:[%s217 + $0x8] sm:$0xff]
        %v265 = vadd.f32 %v248, 0.0
        %v266 = vadd.f32 %v264, %v265
        %267 = vst [vmem:[%s217 + $0x8] sm:$0xff] %v266
        %v268 = vld [vmem:[%s217 + $0x10] sm:$0xff]
        %v269 = vadd.f32 %v229, 0.0
        %v270 = vadd.f32 %v268, %v269
        %271 = vst [vmem:[%s217 + $0x10] sm:$0xff] %v270
        %v272 = vld [vmem:[%s217 + $0x18] sm:$0xff]
        %v273 = vadd.f32 %v258, 0.0
        %v274 = vadd.f32 %v272, %v273
        %275 = vst [vmem:[%s217 + $0x18] sm:$0xff] %v274
        %s276 = sand.u32 %s98, 1
        %s277 = scalar_lea.sflag [#allocation4], %s276
        %s278 = sand.u32 %s98, 1
        %s279 = smul.addr %s278, 32
        %s280 = scalar_lea.vmem [#allocation7], %s279
        // Predicated region
        $region41: #{tpu_custom_call.1} parent=27 // pred_check
          %p281 = pneg %p108
        $region42: #{tpu_custom_call.1} parent=27 // pred_check_branch
          %283 = sbr.rel (%p281) target = $region44
        $region43: #{tpu_custom_call.1} parent=27 // pred_region
          %285 = vsyncadd %s277, 0
          %s286 = smul.addr %s26, 4
          %s287 = smul.addr %s286, 8
          %s288 = scalar_lea.hbm %s2, %s287
          %s289 = sshll.u32 %s280, 4
          %s290 = int_to_ptr.vmem [resolvable:$true] %s289
          %s291 = sshll.u32 %s288, 4
          %s292 = int_to_ptr.hbm [resolvable:$true] %s291
          %297 = dma.vmem_to_hbm [thread:$0]  %s290, 512, %s292, %s277, 128, 128, 8
        $region44: #{tpu_custom_call.1} parent=27 // pred_fallthru
          _
      $region28: #{tpu_custom_call.1} parent=5 // pred_fallthru
        _
      %p298 = scmp.le.s32.totalorder 2, %s17
      // Predicated region
      $region45: #{tpu_custom_call.1} parent=5 // pred_check
        %p299 = pneg %p298
      $region46: #{tpu_custom_call.1} parent=5 // pred_check_branch
        %301 = sbr.rel (%p299) target = $region48
      $region47: #{tpu_custom_call.1} parent=5 // pred_region
        %s302 = ssub.s32 %s17, 2
        // Predicated region
        $region49: #{tpu_custom_call.1} parent=47 // pred_check
          %p303 = pneg %p114
        $region50: #{tpu_custom_call.1} parent=47 // pred_check_branch
          %305 = sbr.rel (%p303) target = $region52
        $region51: #{tpu_custom_call.1} parent=47 // pred_region
          %s306 = sand.u32 %s99, 1
          %s307 = scalar_lea.sflag [#allocation4], %s306
          %s308 = sand.u32 %s99, 1
          %s309 = smul.addr %s308, 32
          %s310 = scalar_lea.vmem [#allocation7], %s309
          %312 = dma.done %s307, 512
        $region52: #{tpu_custom_call.1} parent=47 // pred_fallthru
          _
      $region48: #{tpu_custom_call.1} parent=5 // pred_fallthru
        _
    $region6: #{tpu_custom_call.1} parent=1 // loop_footer
      %s21 = sadd.s32 1, %s17
    $region7: #{tpu_custom_call.1} parent=1 // loop_footer_branch
      %16 = sbr.rel target = $region3
    $region8: #{tpu_custom_call.1} parent=1 // loop_exit
      _
    %313 = vsyncpa [#allocation3], 1
    %s314 = scalar_lea.sflag [#allocation3], 1
    %315 = vsyncpa %s314, 1
    %316 = vsyncpa [#allocation6], 1
    %s317 = scalar_lea.sflag [#allocation6], 1
    %318 = vsyncpa %s317, 1
    %319 = vsyncpa [#allocation4], 1
    %s320 = scalar_lea.sflag [#allocation4], 1
    %321 = vsyncpa %s320, 1

</llo_original>
